<compile_context>
chip_gen: v7x
topology: tpu7x:2x2x1
jax: 0.10.0
libtpu: 0.0.40
codegen_flags: <defaults>
</compile_context>

<pallas_src>
from functools import partial

import jax
import jax.numpy as jnp
from jax import lax
from jax.experimental import pallas as pl
from jax.experimental.pallas import tpu as pltpu

_STATIC_UNROLL_MAX = 8  # above this many slabs, use lax.fori_loop


def _se_kernel(x_ref, gamma_ref, beta_ref, w1_ref, b1_ref, w2_ref, b2_ref,
               o_ref, *, n_tokens, toks_per_slab):
    """x_ref/o_ref blocks: (TB, N*C), lane-dense.  Params are full (small) arrays."""
    N = n_tokens
    tps = toks_per_slab
    C = gamma_ref.shape[-1]
    TB = x_ref.shape[0]
    slab = tps * C
    n_slabs = N // tps
    use_fori = (n_slabs > _STATIC_UNROLL_MAX) and (slab % 128 == 0)

    # ---- Phase 1: token mean, slab-dense accumulation -> (TB, slab) f32 ----
    if use_fori:
        def mean_body(s, acc):
            start = pl.multiple_of(s * slab, 128)
            return acc + x_ref[:, pl.ds(start, slab)].astype(jnp.float32)

        acc = lax.fori_loop(0, n_slabs, mean_body,
                            jnp.zeros((TB, slab), jnp.float32),
                            unroll=min(8, n_slabs))
    else:
        acc = x_ref[:, 0:slab].astype(jnp.float32)
        for s in range(1, n_slabs):
            acc = acc + x_ref[:, s * slab:(s + 1) * slab].astype(jnp.float32)

    # Fold token groups inside the slab down to (TB, C).  Two stages: first
    # 128-lane-dense adds, then a few C-wide sub-vreg adds (cheap, hidden).
    if C < 128 and 128 % C == 0 and slab % 128 == 0:
        fold_w = 128
    else:
        fold_w = C
    r = acc[:, :fold_w]
    for j in range(1, slab // fold_w):
        r = r + acc[:, j * fold_w:(j + 1) * fold_w]
    a = r[:, :C]
    for t in range(1, fold_w // C):
        a = a + r[:, t * C:(t + 1) * C]
    a = a * (1.0 / N)                                              # (TB, C)

    # ---- Phase 2: LayerNorm (eps=1e-5) -> Linear -> ReLU -> Linear -> Tanh ----
    mu = jnp.mean(a, axis=-1, keepdims=True)
    var = jnp.mean((a - mu) * (a - mu), axis=-1, keepdims=True)
    a_ln = (a - mu) * lax.rsqrt(var + 1e-5) * gamma_ref[...] + beta_ref[...]

    h = jnp.dot(a_ln, w1_ref[...], preferred_element_type=jnp.float32) + b1_ref[...]
    h = jnp.maximum(h, 0.0)
    g = jnp.tanh(jnp.dot(h, w2_ref[...], preferred_element_type=jnp.float32)
                 + b2_ref[...])                                    # (TB, C)

    # ---- Phase 3: gate & store, lane-dense slabs ---------------------------
    # bf16 inputs: multiply in bf16 (halves VALU + vreg footprint on v6e/v7x);
    # f32 inputs keep f32 math.  Gate replication is hoisted out of the loop.
    gate_dtype = jnp.bfloat16 if o_ref.dtype == jnp.bfloat16 else jnp.float32
    g_rep = jnp.tile(g.astype(gate_dtype), (1, tps))               # (TB, slab)

    def gate_slab(start):
        xs = x_ref[:, pl.ds(start, slab)].astype(gate_dtype)
        o_ref[:, pl.ds(start, slab)] = (g_rep * xs).astype(o_ref.dtype)

    if use_fori:
        def gate_body(s, carry):
            gate_slab(pl.multiple_of(s * slab, 128))
            return carry

        lax.fori_loop(0, n_slabs, gate_body, 0, unroll=min(8, n_slabs))
    else:
        for s in range(n_slabs):
            gate_slab(s * slab)


def _round_up(x, m):
    return (x + m - 1) // m * m


def _vmem_capacity_bytes():
    """Per-core VMEM capacity; conservative (v7x) fallback if the query fails."""
    try:
        info = pltpu.get_tpu_info()
        cap = getattr(info, "vmem_capacity_bytes", None)
        if cap:
            return int(cap)
    except Exception:
        pass
    return 64 << 20


def _choose_tb(B, flat, itemsize, target_tile_bytes):
    """Tile height (multiple of 8) dividing the padded batch; prefer >=4 grid
    steps (>=2 per TensorCore under megacore), then >=2, within the byte budget."""
    b_pad = _round_up(B, 8)
    cands = [d for d in range(8, b_pad + 1, 8) if b_pad % d == 0]
    bytes_per_row = max(1, flat * itemsize)
    tb_budget = max(8, target_tile_bytes // bytes_per_row)
    fits = [d for d in cands if d <= tb_budget] or [8]
    for min_steps in (4, 2):
        multi = [d for d in fits if b_pad // d >= min_steps]
        if multi:
            return max(multi), b_pad
    return max(fits), b_pad


def _choose_toks_per_slab(N, C, TB, max_slab_lanes, max_acc_bytes=96 * 1024):
    """Largest divisor d of N with d*C a multiple of 128 (unmasked dense vst)
    that keeps the f32 accumulator / replicated gate vreg-resident."""
    lane_cap = max(C, min(max_slab_lanes, max_acc_bytes // max(1, TB * 4)))
    divs = [d for d in range(1, N + 1) if N % d == 0]
    aligned = [d for d in divs if (d * C) % 128 == 0]
    if aligned:
        fits = [d for d in aligned if d * C <= lane_cap]
        return max(fits) if fits else min(aligned)
    # TODO(synk): no 128-aligned slab exists for this (N, C); the gate-phase
    # stores fall back to masked vst on slab tails (only hurts on v5e).
    fits = [d for d in divs if d * C <= lane_cap]
    return max(fits) if fits else 1


def se_forward(x, gamma, beta, w1, b1, w2, b2, *, target_tile_bytes=None,
               max_slab_lanes=4096):
    """x: (B, N, C).  gamma/beta: (1, C).  w1: (C, H), b1: (1, H), w2: (H, C),
    b2: (1, C) — note w1/w2 are (in, out), i.e. PyTorch Linear.weight.T."""
    B, N, C = x.shape
    H = w1.shape[1]
    flat = N * C
    itemsize = jnp.dtype(x.dtype).itemsize

    vmem_cap = _vmem_capacity_bytes()
    if target_tile_bytes is None:
        # Keep ~4.5 tile buffers (2 in + 2 out + slack) inside ~75% of VMEM;
        # cap at 16 MiB.  -> ~16 MiB tiles on v5e/v6e, ~9.6 MiB on v7x.
        target_tile_bytes = int(min(16 << 20, max(1 << 20, (vmem_cap * 3 // 4) // 5)))

    TB, B_pad = _choose_tb(B, flat, itemsize, target_tile_bytes)
    tps = _choose_toks_per_slab(N, C, TB, max_slab_lanes)

    # Lane-dense layout: row-major reshape, x_flat[b, n*C + c] == x[b, n, c].
    x_flat = x.reshape(B, flat)
    if B_pad != B:
        x_flat = jnp.pad(x_flat, ((0, B_pad - B), (0, 0)))

    tile_bytes = TB * flat * itemsize
    param_bytes = (2 * C + C * H + H + H * C + C) * 4
    vmem_limit = int(max(8 << 20,
                         min(int(0.9 * vmem_cap),
                             int(4.5 * tile_bytes) + 8 * param_bytes + (2 << 20))))

    kernel = partial(_se_kernel, n_tokens=N, toks_per_slab=tps)

    cost = pl.CostEstimate(
        flops=int(2 * B_pad * (C * H + H * C) + B_pad * flat),
        transcendentals=int(B_pad * C),
        bytes_accessed=int(2 * B_pad * flat * itemsize + param_bytes),
    )

    out_flat = pl.pallas_call(
        kernel,
        out_shape=jax.ShapeDtypeStruct((B_pad, flat), x.dtype),
        grid_spec=pltpu.PrefetchScalarGridSpec(
            num_scalar_prefetch=0,
            grid=(B_pad // TB,),
            in_specs=[
                pl.BlockSpec((TB, flat), lambda b: (b, 0)),   # x, batch-tiled
                pl.BlockSpec((1, C), lambda b: (0, 0)),        # LN gamma
                pl.BlockSpec((1, C), lambda b: (0, 0)),        # LN beta
                pl.BlockSpec((C, H), lambda b: (0, 0)),        # fc1 weight (in, out)
                pl.BlockSpec((1, H), lambda b: (0, 0)),        # fc1 bias
                pl.BlockSpec((H, C), lambda b: (0, 0)),        # fc2 weight (in, out)
                pl.BlockSpec((1, C), lambda b: (0, 0)),        # fc2 bias
            ],
            out_specs=pl.BlockSpec((TB, flat), lambda b: (b, 0)),
        ),
        compiler_params=pltpu.CompilerParams(
            dimension_semantics=("parallel",),
            vmem_limit_bytes=vmem_limit,
        ),
        cost_estimate=cost,
    )(x_flat, gamma, beta, w1, b1, w2, b2)

    if B_pad != B:
        out_flat = out_flat[:B]
    return out_flat.reshape(B, N, C)


def se_reference(x, gamma, beta, w1, b1, w2, b2):
    """Plain-JAX reference matching the PyTorch forward, for verification."""
    a = jnp.mean(x, axis=1, keepdims=True)                    # (B, 1, C)
    mu = jnp.mean(a, axis=-1, keepdims=True)
    var = jnp.mean((a - mu) ** 2, axis=-1, keepdims=True)
    a = (a - mu) / jnp.sqrt(var + 1e-5) * gamma[0] + beta[0]
    a = jnp.maximum(a @ w1 + b1[0], 0.0)
    a = jnp.tanh(a @ w2 + b2[0])
    return a * x


def _make_params(key, C, H):
    kg, kb, kw1, kb1, kw2, kb2 = jax.random.split(key, 6)
    gamma = 1.0 + 0.1 * jax.random.normal(kg, (1, C), dtype=jnp.float32)
    beta = 0.1 * jax.random.normal(kb, (1, C), dtype=jnp.float32)
    w1 = 0.05 * jax.random.normal(kw1, (C, H), dtype=jnp.float32)
    b1 = 0.05 * jax.random.normal(kb1, (1, H), dtype=jnp.float32)
    w2 = 0.05 * jax.random.normal(kw2, (H, C), dtype=jnp.float32)
    b2 = 0.05 * jax.random.normal(kb2, (1, C), dtype=jnp.float32)
    return gamma, beta, w1, b1, w2, b2


if __name__ == "__main__":
    key = jax.random.PRNGKey(0)

    # (B, N, C, H, extra kwargs) — three small configs exercising:
    #  1) static slab loops, exact batch tiling (SE(dim=32), hidden_ratio=1);
    #  2) the lax.fori_loop path (many slabs) via a small slab cap;
    #  3) batch padding (B not a multiple of 8) and H != C.
    configs = [
        (16, 8, 32, 32, {}),
        (16, 64, 32, 32, {"max_slab_lanes": 128}),
        (10, 8, 32, 48, {}),
    ]

    for idx, (B, N, C, H, kwargs) in enumerate(configs):
        key, kx, kp = jax.random.split(key, 3)
        x = jax.random.normal(kx, (B, N, C), dtype=jnp.float32)
        gamma, beta, w1, b1, w2, b2 = _make_params(kp, C, H)

        out = se_forward(x, gamma, beta, w1, b1, w2, b2, **kwargs)
        out = jax.block_until_ready(out)

        ref = se_reference(x, gamma, beta, w1, b1, w2, b2)
        assert out.shape == (B, N, C)
        assert jnp.allclose(out, ref, atol=2e-5, rtol=2e-5), (
            f"mismatch vs reference in config {idx}")

    print("KERNEL_OK")
</pallas_src>

<mosaic_0001>
module attributes {stable_mosaic.version = 11 : i64} {
  func.func @_se_kernel(%arg0: i32, %arg1: memref<8x256xf32, #tpu.memory_space<vmem>>, %arg2: memref<1x32xf32, #tpu.memory_space<vmem>>, %arg3: memref<1x32xf32, #tpu.memory_space<vmem>>, %arg4: memref<32x32xf32, #tpu.memory_space<vmem>>, %arg5: memref<1x32xf32, #tpu.memory_space<vmem>>, %arg6: memref<32x32xf32, #tpu.memory_space<vmem>>, %arg7: memref<1x32xf32, #tpu.memory_space<vmem>>, %arg8: memref<8x256xf32, #tpu.memory_space<vmem>>) attributes {dimension_semantics = [#tpu.dimension_semantics<parallel>], iteration_bounds = array<i64: 2>, scalar_prefetch = 0 : i64, scratch_operands = 0 : i64, tpu.core_type = #tpu.core_type<tc>, window_params = [{transform_indices = @transform_0, window_bounds = array<i64: 8, 256>}, {pipeline_mode = #tpu.pipeline_mode<synchronous>, transform_indices = @transform_1, window_bounds = array<i64: 1, 32>}, {pipeline_mode = #tpu.pipeline_mode<synchronous>, transform_indices = @transform_2, window_bounds = array<i64: 1, 32>}, {pipeline_mode = #tpu.pipeline_mode<synchronous>, transform_indices = @transform_3, window_bounds = array<i64: 32, 32>}, {pipeline_mode = #tpu.pipeline_mode<synchronous>, transform_indices = @transform_4, window_bounds = array<i64: 1, 32>}, {pipeline_mode = #tpu.pipeline_mode<synchronous>, transform_indices = @transform_5, window_bounds = array<i64: 32, 32>}, {pipeline_mode = #tpu.pipeline_mode<synchronous>, transform_indices = @transform_6, window_bounds = array<i64: 1, 32>}, {transform_indices = @transform_7, window_bounds = array<i64: 8, 256>}]} {
    %c0 = arith.constant 0 : index
    %c0_0 = arith.constant 0 : index
    %0 = vector.load %arg1[%c0, %c0_0] : memref<8x256xf32, #tpu.memory_space<vmem>>, vector<8x256xf32>
    %1 = vector.extract_strided_slice %0 {offsets = [0, 0], sizes = [8, 128], strides = [1, 1]} : vector<8x256xf32> to vector<8x128xf32>
    %2 = vector.extract_strided_slice %0 {offsets = [0, 128], sizes = [8, 128], strides = [1, 1]} : vector<8x256xf32> to vector<8x128xf32>
    %3 = arith.addf %1, %2 : vector<8x128xf32>
    %4 = vector.extract_strided_slice %3 {offsets = [0, 0], sizes = [8, 32], strides = [1, 1]} : vector<8x128xf32> to vector<8x32xf32>
    %5 = vector.extract_strided_slice %3 {offsets = [0, 32], sizes = [8, 32], strides = [1, 1]} : vector<8x128xf32> to vector<8x32xf32>
    %6 = arith.addf %4, %5 : vector<8x32xf32>
    %7 = vector.extract_strided_slice %3 {offsets = [0, 64], sizes = [8, 32], strides = [1, 1]} : vector<8x128xf32> to vector<8x32xf32>
    %8 = arith.addf %6, %7 : vector<8x32xf32>
    %9 = vector.extract_strided_slice %3 {offsets = [0, 96], sizes = [8, 32], strides = [1, 1]} : vector<8x128xf32> to vector<8x32xf32>
    %10 = arith.addf %8, %9 : vector<8x32xf32>
    %cst = arith.constant 1.250000e-01 : f32
    %11 = vector.broadcast %cst : f32 to vector<8x32xf32>
    %12 = arith.mulf %10, %11 : vector<8x32xf32>
    %cst_1 = arith.constant dense<0.000000e+00> : vector<8xf32>
    %13 = vector.multi_reduction <add>, %12, %cst_1 [1] : vector<8x32xf32> to vector<8xf32>
    %14 = vector.shape_cast %13 : vector<8xf32> to vector<8x1xf32>
    %cst_2 = arith.constant 3.200000e+01 : f32
    %15 = vector.broadcast %cst_2 : f32 to vector<8x1xf32>
    %16 = arith.divf %14, %15 : vector<8x1xf32>
    %17 = vector.broadcast %16 : vector<8x1xf32> to vector<8x32xf32>
    %18 = arith.subf %12, %17 : vector<8x32xf32>
    %19 = vector.broadcast %16 : vector<8x1xf32> to vector<8x32xf32>
    %20 = arith.subf %12, %19 : vector<8x32xf32>
    %21 = arith.mulf %18, %20 : vector<8x32xf32>
    %cst_3 = arith.constant dense<0.000000e+00> : vector<8xf32>
    %22 = vector.multi_reduction <add>, %21, %cst_3 [1] : vector<8x32xf32> to vector<8xf32>
    %23 = vector.shape_cast %22 : vector<8xf32> to vector<8x1xf32>
    %cst_4 = arith.constant 3.200000e+01 : f32
    %24 = vector.broadcast %cst_4 : f32 to vector<8x1xf32>
    %25 = arith.divf %23, %24 : vector<8x1xf32>
    %26 = vector.broadcast %16 : vector<8x1xf32> to vector<8x32xf32>
    %27 = arith.subf %12, %26 : vector<8x32xf32>
    %cst_5 = arith.constant 9.99999974E-6 : f32
    %28 = vector.broadcast %cst_5 : f32 to vector<8x1xf32>
    %29 = arith.addf %25, %28 : vector<8x1xf32>
    %30 = math.rsqrt %29 : vector<8x1xf32>
    %31 = vector.broadcast %30 : vector<8x1xf32> to vector<8x32xf32>
    %32 = arith.mulf %27, %31 : vector<8x32xf32>
    %c0_6 = arith.constant 0 : index
    %c0_7 = arith.constant 0 : index
    %33 = vector.load %arg2[%c0_6, %c0_7] : memref<1x32xf32, #tpu.memory_space<vmem>>, vector<1x32xf32>
    %34 = vector.broadcast %33 : vector<1x32xf32> to vector<8x32xf32>
    %35 = arith.mulf %32, %34 : vector<8x32xf32>
    %c0_8 = arith.constant 0 : index
    %c0_9 = arith.constant 0 : index
    %36 = vector.load %arg3[%c0_8, %c0_9] : memref<1x32xf32, #tpu.memory_space<vmem>>, vector<1x32xf32>
    %37 = vector.broadcast %36 : vector<1x32xf32> to vector<8x32xf32>
    %38 = arith.addf %35, %37 : vector<8x32xf32>
    %c0_10 = arith.constant 0 : index
    %c0_11 = arith.constant 0 : index
    %39 = vector.load %arg4[%c0_10, %c0_11] : memref<32x32xf32, #tpu.memory_space<vmem>>, vector<32x32xf32>
    %cst_12 = arith.constant dense<0.000000e+00> : vector<8x32xf32>
    %40 = tpu.matmul %38, %39, %cst_12 {dimension_numbers = #tpu.dot_dimension_numbers<[1], [0], [0], [1], [0, 0, 1, 1], [], []>} : vector<8x32xf32>, vector<32x32xf32>, vector<8x32xf32> -> vector<8x32xf32>
    %c0_13 = arith.constant 0 : index
    %c0_14 = arith.constant 0 : index
    %41 = vector.load %arg5[%c0_13, %c0_14] : memref<1x32xf32, #tpu.memory_space<vmem>>, vector<1x32xf32>
    %42 = vector.broadcast %41 : vector<1x32xf32> to vector<8x32xf32>
    %43 = arith.addf %40, %42 : vector<8x32xf32>
    %cst_15 = arith.constant 0.000000e+00 : f32
    %44 = vector.broadcast %cst_15 : f32 to vector<8x32xf32>
    %45 = arith.maximumf %43, %44 : vector<8x32xf32>
    %c0_16 = arith.constant 0 : index
    %c0_17 = arith.constant 0 : index
    %46 = vector.load %arg6[%c0_16, %c0_17] : memref<32x32xf32, #tpu.memory_space<vmem>>, vector<32x32xf32>
    %cst_18 = arith.constant dense<0.000000e+00> : vector<8x32xf32>
    %47 = tpu.matmul %45, %46, %cst_18 {dimension_numbers = #tpu.dot_dimension_numbers<[1], [0], [0], [1], [0, 0, 1, 1], [], []>} : vector<8x32xf32>, vector<32x32xf32>, vector<8x32xf32> -> vector<8x32xf32>
    %c0_19 = arith.constant 0 : index
    %c0_20 = arith.constant 0 : index
    %48 = vector.load %arg7[%c0_19, %c0_20] : memref<1x32xf32, #tpu.memory_space<vmem>>, vector<1x32xf32>
    %49 = vector.broadcast %48 : vector<1x32xf32> to vector<8x32xf32>
    %50 = arith.addf %47, %49 : vector<8x32xf32>
    %51 = math.tanh %50 : vector<8x32xf32>
    %52 = tpu.concatenate %51, %51, %51, %51, %51, %51, %51, %51 in 1 : vector<8x32xf32>, vector<8x32xf32>, vector<8x32xf32>, vector<8x32xf32>, vector<8x32xf32>, vector<8x32xf32>, vector<8x32xf32>, vector<8x32xf32> -> vector<8x256xf32>
    %c0_21 = arith.constant 0 : index
    %c0_22 = arith.constant 0 : index
    %53 = vector.load %arg1[%c0_21, %c0_22] : memref<8x256xf32, #tpu.memory_space<vmem>>, vector<8x256xf32>
    %54 = arith.mulf %52, %53 : vector<8x256xf32>
    %c0_23 = arith.constant 0 : index
    %c0_24 = arith.constant 0 : index
    %55 = vector.load %arg8[%c0_23, %c0_24] : memref<8x256xf32, #tpu.memory_space<vmem>>, vector<8x256xf32>
    tpu.vector_store %arg8[%c0_23, %c0_24], %54 {strides = array<i32>} : memref<8x256xf32, #tpu.memory_space<vmem>>, vector<8x256xf32>,
    return
  }
  func.func @transform_0(%arg0: i32) -> (i32, i32) {
    %c0_i32 = arith.constant 0 : i32
    %c0_i32_0 = arith.constant 0 : i32
    return %arg0, %c0_i32 : i32, i32
  }
  func.func @transform_1(%arg0: i32) -> (i32, i32) {
    %c0_i32 = arith.constant 0 : i32
    %c0_i32_0 = arith.constant 0 : i32
    %c0_i32_1 = arith.constant 0 : i32
    return %c0_i32, %c0_i32_0 : i32, i32
  }
  func.func @transform_2(%arg0: i32) -> (i32, i32) {
    %c0_i32 = arith.constant 0 : i32
    %c0_i32_0 = arith.constant 0 : i32
    %c0_i32_1 = arith.constant 0 : i32
    return %c0_i32, %c0_i32_0 : i32, i32
  }
  func.func @transform_3(%arg0: i32) -> (i32, i32) {
    %c0_i32 = arith.constant 0 : i32
    %c0_i32_0 = arith.constant 0 : i32
    %c0_i32_1 = arith.constant 0 : i32
    return %c0_i32, %c0_i32_0 : i32, i32
  }
  func.func @transform_4(%arg0: i32) -> (i32, i32) {
    %c0_i32 = arith.constant 0 : i32
    %c0_i32_0 = arith.constant 0 : i32
    %c0_i32_1 = arith.constant 0 : i32
    return %c0_i32, %c0_i32_0 : i32, i32
  }
  func.func @transform_5(%arg0: i32) -> (i32, i32) {
    %c0_i32 = arith.constant 0 : i32
    %c0_i32_0 = arith.constant 0 : i32
    %c0_i32_1 = arith.constant 0 : i32
    return %c0_i32, %c0_i32_0 : i32, i32
  }
  func.func @transform_6(%arg0: i32) -> (i32, i32) {
    %c0_i32 = arith.constant 0 : i32
    %c0_i32_0 = arith.constant 0 : i32
    %c0_i32_1 = arith.constant 0 : i32
    return %c0_i32, %c0_i32_0 : i32, i32
  }
  func.func @transform_7(%arg0: i32) -> (i32, i32) {
    %c0_i32 = arith.constant 0 : i32
    %c0_i32_0 = arith.constant 0 : i32
    return %arg0, %c0_i32 : i32, i32
  }
}

</mosaic_0001>

<llo_original>
// kernel: tpu_custom_call.1
$region0: #{tpu_custom_call.1}
  #allocation0 [shape = 'u32[]', space=smem, size = 0x4, offset = 0x4, fixed_abs, tag = 'smem constant byte address 0x4 - core index']
  #allocation1 [shape = 'u32[144,128]{1,0:T(1,128)}', space=vmem, size = 0x12000, scoped, tag = 'internal scratch']
  %s0 = inlined_call_operand.hbm [shape: f32[16,256], index: 0, kind: input, shape index: {}]
  %s1 = inlined_call_operand.vmem [shape: f32[1,32], index: 1, kind: input, shape index: {}]
  %s2 = inlined_call_operand.vmem [shape: f32[1,32], index: 2, kind: input, shape index: {}]
  %s3 = inlined_call_operand.hbm [shape: f32[32,32], index: 3, kind: input, shape index: {}]
  %s4 = inlined_call_operand.vmem [shape: f32[1,32], index: 4, kind: input, shape index: {}]
  %s5 = inlined_call_operand.hbm [shape: f32[32,32], index: 5, kind: input, shape index: {}]
  %s6 = inlined_call_operand.vmem [shape: f32[1,32], index: 6, kind: input, shape index: {}]
  %s7 = inlined_call_operand.hbm [shape: f32[16,256], index: 7, kind: output, shape index: {}]
  %s8 = sld [smem:[#allocation0]]
  $region73: #{tpu_custom_call.1} parent=0
    _
  %s10 = ssub.s32 1, %s8
  %s11 = scalar_select 0, %s10, %s8
  $region1: #{tpu_custom_call.1} parent=0
    #allocation2 [shape = 'u8[16384]{0}', space=vmem, size = 0x4000, scoped, tag = 'input window, operand 0']
    #allocation3 [shape = 's32[2]{0}', space=sflag, size = 0x8, scoped, tag = 'scoped memory for tpu_custom_call.1']
    #allocation4 [shape = 's32[2]{0}', space=sflag, size = 0x8, scoped, tag = 'scoped memory for tpu_custom_call.1']
    #allocation5 [shape = 'u8[16384]{0}', space=vmem, size = 0x4000, scoped, tag = 'input window, operand 3, single buffered']
    #allocation6 [shape = 's32[1]{0}', space=sflag, size = 0x4, scoped, tag = 'scoped memory for tpu_custom_call.1']
    #allocation7 [shape = 'u8[16384]{0}', space=vmem, size = 0x4000, scoped, tag = 'input window, operand 5, single buffered']
    #allocation8 [shape = 'u8[16384]{0}', space=vmem, size = 0x4000, scoped, tag = 'output window, operand 0']
    %12 = vsyncpa [#allocation3], 0
    %s13 = scalar_lea.sflag [#allocation3], 1
    %14 = vsyncpa %s13, 0
    %15 = vsyncpa [#allocation6], 0
    %16 = vsyncpa [#allocation4], 0
    %s17 = scalar_lea.sflag [#allocation4], 1
    %18 = vsyncpa %s17, 0
    loop: start=0, step=1, limit=4
    $region2: #{tpu_custom_call.1} parent=1 // loop_pre_header
      _
    $region3: #{tpu_custom_call.1} parent=1 // loop_header
      %s20 = sphi 0, %s24
      %p21 = scmp.ge.s32.totalorder %s20, 4
      %s30 = sphi 0, %s32
      %s33 = sphi 0, %s30
      %s34 = sphi 0, %s33
      %s50 = sphi 0, %s34
      %s54 = sphi 0, %s54
      %s56 = sphi 0, %s54
      %s57 = sphi 0, %s56
      %s71 = sphi 0, %s57
      %s75 = sphi 0, %s75
      %s77 = sphi 0, %s75
      %s78 = sphi 0, %s77
      %s92 = sphi 0, %s78
      %s96 = sphi 0, %s96
      %s98 = sphi 0, %s96
      %s99 = sphi 0, %s98
      %s113 = sphi 0, %s99
      %s117 = sphi 0, %s117
      %s119 = sphi 0, %s117
      %s120 = sphi 0, %s119
      %s134 = sphi 0, %s120
      %s138 = sphi 0, %s138
      %s140 = sphi 0, %s138
      %s141 = sphi 0, %s140
      %s155 = sphi 0, %s141
      %s159 = sphi 0, %s159
      %s161 = sphi 0, %s159
      %s162 = sphi 0, %s161
      %s176 = sphi 0, %s162
      %s182 = sphi 0, %s184
      %s185 = sphi 0, %s182
      %s186 = sphi 0, %s185
      %s202 = sphi 0, %s186
    $region4: #{tpu_custom_call.1} parent=1 // loop_header_branch
      %23 = sbr.rel (%p21) target = $region8
    $region5: #{tpu_custom_call.1} parent=1 // loop_body
      %s25 = ssub.s32 %s20, 1
      %s26 = ssub.s32 %s20, 2
      %s27 = sadd.s32 %s20, 1
      %s28 = ssub.s32 %s20, %s27
      %p29 = scmp.eq.s32.totalorder %s28, 0
      %s31 = sadd.s32 %s30, 1
      %s32 = scalar_select %p29, %s30, %s31
      %p35 = pneg %p29
      %p36 = scmp.eq.s32.totalorder %s20, 1
      %p37 = por %p35, %p36
      %p38 = scmp.ne.s32.totalorder %s30, %s33
      %p39 = scmp.eq.s32.totalorder %s20, 0
      %p40 = por %p38, %p39
      %p41 = scmp.ne.s32.totalorder %s30, %s33
      %p42 = scmp.eq.s32.totalorder %s25, 1
      %p43 = por %p41, %p42
      %p44 = scmp.ne.s32.totalorder %s33, %s34
      %p45 = scmp.eq.s32.totalorder %s25, 0
      %p46 = por %p44, %p45
      %p47 = scmp.ne.s32.totalorder %s33, %s34
      %p48 = scmp.eq.s32.totalorder %s26, 1
      %p49 = por %p47, %p48
      %p51 = scmp.ne.s32.totalorder %s34, %s50
      %p52 = scmp.eq.s32.totalorder %s26, 0
      %p53 = por %p51, %p52
      %s55 = sadd.s32 %s54, 1
      %p58 = scmp.eq.s32.totalorder %s20, 1
      %p59 = scmp.ne.s32.totalorder %s54, %s56
      %p60 = scmp.eq.s32.totalorder %s20, 0
      %p61 = por %p59, %p60
      %p62 = scmp.ne.s32.totalorder %s54, %s56
      %p63 = scmp.eq.s32.totalorder %s25, 1
      %p64 = por %p62, %p63
      %p65 = scmp.ne.s32.totalorder %s56, %s57
      %p66 = scmp.eq.s32.totalorder %s25, 0
      %p67 = por %p65, %p66
      %p68 = scmp.ne.s32.totalorder %s56, %s57
      %p69 = scmp.eq.s32.totalorder %s26, 1
      %p70 = por %p68, %p69
      %p72 = scmp.ne.s32.totalorder %s57, %s71
      %p73 = scmp.eq.s32.totalorder %s26, 0
      %p74 = por %p72, %p73
      %s76 = sadd.s32 %s75, 1
      %p79 = scmp.eq.s32.totalorder %s20, 1
      %p80 = scmp.ne.s32.totalorder %s75, %s77
      %p81 = scmp.eq.s32.totalorder %s20, 0
      %p82 = por %p80, %p81
      %p83 = scmp.ne.s32.totalorder %s75, %s77
      %p84 = scmp.eq.s32.totalorder %s25, 1
      %p85 = por %p83, %p84
      %p86 = scmp.ne.s32.totalorder %s77, %s78
      %p87 = scmp.eq.s32.totalorder %s25, 0
      %p88 = por %p86, %p87
      %p89 = scmp.ne.s32.totalorder %s77, %s78
      %p90 = scmp.eq.s32.totalorder %s26, 1
      %p91 = por %p89, %p90
      %p93 = scmp.ne.s32.totalorder %s78, %s92
      %p94 = scmp.eq.s32.totalorder %s26, 0
      %p95 = por %p93, %p94
      %s97 = sadd.s32 %s96, 1
      %p100 = scmp.eq.s32.totalorder %s20, 1
      %p101 = scmp.ne.s32.totalorder %s96, %s98
      %p102 = scmp.eq.s32.totalorder %s20, 0
      %p103 = por %p101, %p102
      %p104 = scmp.ne.s32.totalorder %s96, %s98
      %p105 = scmp.eq.s32.totalorder %s25, 1
      %p106 = por %p104, %p105
      %p107 = scmp.ne.s32.totalorder %s98, %s99
      %p108 = scmp.eq.s32.totalorder %s25, 0
      %p109 = por %p107, %p108
      %p110 = scmp.ne.s32.totalorder %s98, %s99
      %p111 = scmp.eq.s32.totalorder %s26, 1
      %p112 = por %p110, %p111
      %p114 = scmp.ne.s32.totalorder %s99, %s113
      %p115 = scmp.eq.s32.totalorder %s26, 0
      %p116 = por %p114, %p115
      %s118 = sadd.s32 %s117, 1
      %p121 = scmp.eq.s32.totalorder %s20, 1
      %p122 = scmp.ne.s32.totalorder %s117, %s119
      %p123 = scmp.eq.s32.totalorder %s20, 0
      %p124 = por %p122, %p123
      %p125 = scmp.ne.s32.totalorder %s117, %s119
      %p126 = scmp.eq.s32.totalorder %s25, 1
      %p127 = por %p125, %p126
      %p128 = scmp.ne.s32.totalorder %s119, %s120
      %p129 = scmp.eq.s32.totalorder %s25, 0
      %p130 = por %p128, %p129
      %p131 = scmp.ne.s32.totalorder %s119, %s120
      %p132 = scmp.eq.s32.totalorder %s26, 1
      %p133 = por %p131, %p132
      %p135 = scmp.ne.s32.totalorder %s120, %s134
      %p136 = scmp.eq.s32.totalorder %s26, 0
      %p137 = por %p135, %p136
      %s139 = sadd.s32 %s138, 1
      %p142 = scmp.eq.s32.totalorder %s20, 1
      %p143 = scmp.ne.s32.totalorder %s138, %s140
      %p144 = scmp.eq.s32.totalorder %s20, 0
      %p145 = por %p143, %p144
      %p146 = scmp.ne.s32.totalorder %s138, %s140
      %p147 = scmp.eq.s32.totalorder %s25, 1
      %p148 = por %p146, %p147
      %p149 = scmp.ne.s32.totalorder %s140, %s141
      %p150 = scmp.eq.s32.totalorder %s25, 0
      %p151 = por %p149, %p150
      %p152 = scmp.ne.s32.totalorder %s140, %s141
      %p153 = scmp.eq.s32.totalorder %s26, 1
      %p154 = por %p152, %p153
      %p156 = scmp.ne.s32.totalorder %s141, %s155
      %p157 = scmp.eq.s32.totalorder %s26, 0
      %p158 = por %p156, %p157
      %s160 = sadd.s32 %s159, 1
      %p163 = scmp.eq.s32.totalorder %s20, 1
      %p164 = scmp.ne.s32.totalorder %s159, %s161
      %p165 = scmp.eq.s32.totalorder %s20, 0
      %p166 = por %p164, %p165
      %p167 = scmp.ne.s32.totalorder %s159, %s161
      %p168 = scmp.eq.s32.totalorder %s25, 1
      %p169 = por %p167, %p168
      %p170 = scmp.ne.s32.totalorder %s161, %s162
      %p171 = scmp.eq.s32.totalorder %s25, 0
      %p172 = por %p170, %p171
      %p173 = scmp.ne.s32.totalorder %s161, %s162
      %p174 = scmp.eq.s32.totalorder %s26, 1
      %p175 = por %p173, %p174
      %p177 = scmp.ne.s32.totalorder %s162, %s176
      %p178 = scmp.eq.s32.totalorder %s26, 0
      %p179 = por %p177, %p178
      %s180 = ssub.s32 %s20, %s27
      %p181 = scmp.eq.s32.totalorder %s180, 0
      %s183 = sadd.s32 %s182, 1
      %s184 = scalar_select %p181, %s182, %s183
      %p187 = pneg %p181
      %p188 = scmp.eq.s32.totalorder %s20, 1
      %p189 = por %p187, %p188
      %p190 = scmp.ne.s32.totalorder %s182, %s185
      %p191 = scmp.eq.s32.totalorder %s20, 0
      %p192 = por %p190, %p191
      %p193 = scmp.ne.s32.totalorder %s182, %s185
      %p194 = scmp.eq.s32.totalorder %s25, 1
      %p195 = por %p193, %p194
      %p196 = scmp.ne.s32.totalorder %s185, %s186
      %p197 = scmp.eq.s32.totalorder %s25, 0
      %p198 = por %p196, %p197
      %p199 = scmp.ne.s32.totalorder %s185, %s186
      %p200 = scmp.eq.s32.totalorder %s26, 1
      %p201 = por %p199, %p200
      %p203 = scmp.ne.s32.totalorder %s186, %s202
      %p204 = scmp.eq.s32.totalorder %s26, 0
      %p205 = por %p203, %p204
      %p206 = scmp.le.s32.totalorder 1, %s20
      %p207 = scmp.lt.s32.totalorder %s20, 3
      %p208 = pnand %p206, %p207
      %p209 = pneg %p208
      // Predicated region
      $region9: #{tpu_custom_call.1} parent=5 // pred_check
        _
      $region10: #{tpu_custom_call.1} parent=5 // pred_check_branch
        %211 = sbr.rel (%p208) target = $region12
      $region11: #{tpu_custom_call.1} parent=5 // pred_region
        %s212 = ssub.s32 %s20, 1
        // Predicated region
        $region13: #{tpu_custom_call.1} parent=11 // pred_check
          %p213 = pneg %p67
        $region14: #{tpu_custom_call.1} parent=11 // pred_check_branch
          %215 = sbr.rel (%p213) target = $region16
        $region15: #{tpu_custom_call.1} parent=11 // pred_region
          _
        $region16: #{tpu_custom_call.1} parent=11 // pred_fallthru
          _
        // Predicated region
        $region17: #{tpu_custom_call.1} parent=11 // pred_check
          %p216 = pneg %p88
        $region18: #{tpu_custom_call.1} parent=11 // pred_check_branch
          %218 = sbr.rel (%p216) target = $region20
        $region19: #{tpu_custom_call.1} parent=11 // pred_region
          _
        $region20: #{tpu_custom_call.1} parent=11 // pred_fallthru
          _
        // Predicated region
        $region21: #{tpu_custom_call.1} parent=11 // pred_check
          %p219 = pneg %p109
        $region22: #{tpu_custom_call.1} parent=11 // pred_check_branch
          %221 = sbr.rel (%p219) target = $region24
        $region23: #{tpu_custom_call.1} parent=11 // pred_region
          %s223 = ssub.s32 512, 512
          %224 = vsyncadd [#allocation6], %s223
          %s225 = sshll.u32 [#allocation5], 4
          %s226 = int_to_ptr.vmem [resolvable:$true] %s225
          %231 = dma.hbm_to_vmem [thread:$0]  %s3, 512, %s226, [#allocation6], 128, 128, 8
        $region24: #{tpu_custom_call.1} parent=11 // pred_fallthru
          _
        // Predicated region
        $region25: #{tpu_custom_call.1} parent=11 // pred_check
          %p232 = pneg %p130
        $region26: #{tpu_custom_call.1} parent=11 // pred_check_branch
          %234 = sbr.rel (%p232) target = $region28
        $region27: #{tpu_custom_call.1} parent=11 // pred_region
          _
        $region28: #{tpu_custom_call.1} parent=11 // pred_fallthru
          _
        // Predicated region
        $region29: #{tpu_custom_call.1} parent=11 // pred_check
          %p235 = pneg %p151
        $region30: #{tpu_custom_call.1} parent=11 // pred_check_branch
          %237 = sbr.rel (%p235) target = $region32
        $region31: #{tpu_custom_call.1} parent=11 // pred_region
          %s239 = ssub.s32 512, 512
          %240 = vsyncadd [#allocation6], %s239
          %s241 = sshll.u32 [#allocation7], 4
          %s242 = int_to_ptr.vmem [resolvable:$true] %s241
          %247 = dma.hbm_to_vmem [thread:$0]  %s5, 512, %s242, [#allocation6], 128, 128, 8
        $region32: #{tpu_custom_call.1} parent=11 // pred_fallthru
          _
        // Predicated region
        $region33: #{tpu_custom_call.1} parent=11 // pred_check
          %p248 = pneg %p172
        $region34: #{tpu_custom_call.1} parent=11 // pred_check_branch
          %250 = sbr.rel (%p248) target = $region36
        $region35: #{tpu_custom_call.1} parent=11 // pred_region
          _
        $region36: #{tpu_custom_call.1} parent=11 // pred_fallthru
          _
      $region12: #{tpu_custom_call.1} parent=5 // pred_fallthru
        _
      %p251 = scmp.lt.s32.totalorder %s20, 2
      // Predicated region
      $region37: #{tpu_custom_call.1} parent=5 // pred_check
        %p252 = pneg %p251
      $region38: #{tpu_custom_call.1} parent=5 // pred_check_branch
        %254 = sbr.rel (%p252) target = $region40
      $region39: #{tpu_custom_call.1} parent=5 // pred_region
        // Predicated region
        $region41: #{tpu_custom_call.1} parent=39 // pred_check
          %p255 = pneg %p40
        $region42: #{tpu_custom_call.1} parent=39 // pred_check_branch
          %257 = sbr.rel (%p255) target = $region44
        $region43: #{tpu_custom_call.1} parent=39 // pred_region
          %s258 = sand.u32 %s30, 1
          %s259 = scalar_lea.sflag [#allocation3], %s258
          %s260 = sand.u32 %s30, 1
          %s261 = smul.addr %s260, 16
          %s262 = scalar_lea.vmem [#allocation2], %s261
          %s264 = ssub.s32 256, 256
          %265 = vsyncadd %s259, %s264
          %s266 = smul.addr %s20, 2
          %s267 = smul.addr %s266, 128
          %s268 = scalar_lea.hbm %s0, %s267
          %s270 = sshll.u32 %s262, 4
          %s271 = int_to_ptr.vmem [resolvable:$true] %s270
          %273 = dma.hbm_to_vmem [thread:$0]  %s268, 256, %s271, %s259
        $region44: #{tpu_custom_call.1} parent=39 // pred_fallthru
          _
      $region40: #{tpu_custom_call.1} parent=5 // pred_fallthru
        _
      %p274 = scmp.le.s32.totalorder 1, %s20
      %p275 = scmp.lt.s32.totalorder %s20, 3
      %p276 = pnand %p274, %p275
      %p277 = pneg %p276
      // Predicated region
      $region45: #{tpu_custom_call.1} parent=5 // pred_check
        _
      $region46: #{tpu_custom_call.1} parent=5 // pred_check_branch
        %279 = sbr.rel (%p276) target = $region48
      $region47: #{tpu_custom_call.1} parent=5 // pred_region
        %s280 = ssub.s32 %s20, 1
        %s281 = sand.u32 %s33, 1
        %s282 = scalar_lea.sflag [#allocation3], %s281
        %s283 = sand.u32 %s33, 1
        %s284 = smul.addr %s283, 16
        %s285 = scalar_lea.vmem [#allocation2], %s284
        // Predicated region
        $region49: #{tpu_custom_call.1} parent=47 // pred_check
          %p286 = pneg %p46
        $region50: #{tpu_custom_call.1} parent=47 // pred_check_branch
          %288 = sbr.rel (%p286) target = $region52
        $region51: #{tpu_custom_call.1} parent=47 // pred_region
          %289 = dma.done %s282, 256
        $region52: #{tpu_custom_call.1} parent=47 // pred_fallthru
          _
        // Predicated region
        $region53: #{tpu_custom_call.1} parent=47 // pred_check
          %p290 = pneg %p109
        $region54: #{tpu_custom_call.1} parent=47 // pred_check_branch
          %292 = sbr.rel (%p290) target = $region56
        $region55: #{tpu_custom_call.1} parent=47 // pred_region
          %293 = dma.done [#allocation6], 512
        $region56: #{tpu_custom_call.1} parent=47 // pred_fallthru
          _
        // Predicated region
        $region57: #{tpu_custom_call.1} parent=47 // pred_check
          %p294 = pneg %p151
        $region58: #{tpu_custom_call.1} parent=47 // pred_check_branch
          %296 = sbr.rel (%p294) target = $region60
        $region59: #{tpu_custom_call.1} parent=47 // pred_region
          %297 = dma.done [#allocation6], 512
        $region60: #{tpu_custom_call.1} parent=47 // pred_fallthru
          _
        %s298 = sand.u32 %s33, 1
        %s299 = scalar_lea.sflag [#allocation3], %s298
        %s300 = sand.u32 %s33, 1
        %s301 = smul.addr %s300, 16
        %s302 = scalar_lea.vmem [#allocation2], %s301
        %p303 = pneg %p46
        %p304 = pneg %p43
        %p305 = pneg %p67
        %p306 = pneg %p64
        %p307 = pneg %p88
        %p308 = pneg %p85
        %p309 = pneg %p109
        %p310 = pneg %p106
        %p311 = pneg %p130
        %p312 = pneg %p127
        %p313 = pneg %p151
        %p314 = pneg %p148
        %p315 = pneg %p172
        %p316 = pneg %p169
        %p317 = pneg %p198
        %p318 = pneg %p195
        %s319 = sand.u32 %s185, 1
        %s320 = scalar_lea.sflag [#allocation4], %s319
        %s321 = sand.u32 %s185, 1
        %s322 = smul.addr %s321, 16
        %s323 = scalar_lea.vmem [#allocation8], %s322
        %v324 = vld [vmem:[%s285] sm:$0xff]
        %v325 = vld [vmem:[%s285 + $0x8] sm:$0xff]
        %v326 = vadd.f32 %v324, %v325
        %328 = vrot.lane.b32.xlu0 %v326, 96
        %v329 = vpop.permute.xlu0 %328
        %v331 = vadd.f32 %v326, %v329
        %332 = vrot.lane.b32.xlu0 %v326, 64
        %v333 = vpop.permute.xlu0 %332
        %v335 = vadd.f32 %v331, %v333
        %336 = vrot.lane.b32.xlu0 %v326, 32
        %v337 = vpop.permute.xlu0 %336
        %v339 = vadd.f32 %v335, %v337
        %v340 = vmul.f32 %v339, 0.125
        %vm341 = vcmask 261120
        %v342 = vsel %vm341, %v340, 0.0
        %343 = vadd.xlane.f32.xlu0 %v342
        %v344 = vpop.xlane.xlu0 %343
        %v345 = vrcp.pop 32.0
        %v346 = vmul.f32 %v344, %v345
        %v347 = vsub.f32 %v340, %v346
        %v348 = vmul.f32 %v347, %v347
        %v349 = vsel %vm341, %v348, 0.0
        %350 = vadd.xlane.f32.xlu0 %v349
        %v351 = vpop.xlane.xlu0 %350
        %v352 = vmul.f32 %v351, %v345
        %v353 = vadd.f32 %v352, 1e-05
        %v354 = vrsqrt.pop %v353
        %v355 = vmul.f32 %v347, %v354
        %v356 = vld [vmem:[%s1] sm:$0x1]
        %v358 = vlaneseq
        %v359 = vshrl.u32 %v358, 7
        %v360 = vsub.s32 0, %v359
        %v361 = vrot.slane %v356, %v360
        %v363 = vmul.f32 %v355, %v361
        %v364 = vld [vmem:[%s2] sm:$0x1]
        %v366 = vlaneseq
        %v367 = vshrl.u32 %v366, 7
        %v368 = vsub.s32 0, %v367
        %v369 = vrot.slane %v364, %v368
        %v371 = vadd.f32 %v363, %v369
        %v372 = vld [vmem:[#allocation5] sm:$0xff]
        %v373 = vld [vmem:[#allocation5 + $0x8] sm:$0xff]
        %v374 = vld [vmem:[#allocation5 + $0x10] sm:$0xff]
        %v375 = vld [vmem:[#allocation5 + $0x18] sm:$0xff]
        %v376 = vld [vmem:[%s4] sm:$0x1]
        %v378 = vlaneseq
        %v379 = vshrl.u32 %v378, 7
        %v380 = vsub.s32 0, %v379
        %v381 = vrot.slane %v376, %v380
        %v384 = vsel %vm341, %v371, 0
        %386 = vmatprep.subr.mxu0 0.0
        %387 = vmatpush1.msra.mxu0 %v372
        %388 = vmatprep.subr.mxu0 0.0
        %389 = vmatpush1.msra.mxu0 %v373
        %390 = vmatprep.subr.mxu0 0.0
        %391 = vmatpush1.msra.mxu0 %v374
        %392 = vmatprep.subr.mxu0 0.0
        %393 = vmatpush1.msra.mxu0 %v375
        %394 = vmatprep.subr.mxu0 0.0
        %395 = vmatpush1.msra.mxu0 0.0
        %396 = vmatprep.subr.mxu0 0.0
        %397 = vmatpush1.msra.mxu0 0.0
        %398 = vmatprep.subr.mxu0 0.0
        %399 = vmatpush1.msra.mxu0 0.0
        %400 = vmatprep.subr.mxu0 0.0
        %401 = vmatpush1.msra.mxu0 0.0
        %402 = vmatprep.subr.mxu0 0.0
        %403 = vmatpush1.msra.mxu0 0.0
        %404 = vmatprep.subr.mxu0 0.0
        %405 = vmatpush1.msra.mxu0 0.0
        %406 = vmatprep.subr.mxu0 0.0
        %407 = vmatpush1.msra.mxu0 0.0
        %408 = vmatprep.subr.mxu0 0.0
        %409 = vmatpush1.msra.mxu0 0.0
        %410 = vmatprep.subr.mxu0 0.0
        %411 = vmatpush1.msra.mxu0 0.0
        %412 = vmatprep.subr.mxu0 0.0
        %413 = vmatpush1.msra.mxu0 0.0
        %414 = vmatprep.subr.mxu0 0.0
        %415 = vmatpush1.msra.mxu0 0.0
        %416 = vmatprep.subr.mxu0 0.0
        %417 = vmatpush1.msra.mxu0 0.0
        %418 = vmatprep.subr.mxu0 0.0
        %419 = vmatpush1.msra.mxu0 0.0
        %420 = vmatprep.subr.mxu0 0.0
        %421 = vmatpush1.msra.mxu0 0.0
        %422 = vmatprep.subr.mxu0 0.0
        %423 = vmatpush1.msra.mxu0 0.0
        %424 = vmatprep.subr.mxu0 0.0
        %425 = vmatpush1.msra.mxu0 0.0
        %426 = vmatprep.subr.mxu0 0.0
        %427 = vmatpush1.msra.mxu0 0.0
        %428 = vmatprep.subr.mxu0 0.0
        %429 = vmatpush1.msra.mxu0 0.0
        %430 = vmatprep.subr.mxu0 0.0
        %431 = vmatpush1.msra.mxu0 0.0
        %432 = vmatprep.subr.mxu0 0.0
        %433 = vmatpush1.msra.mxu0 0.0
        %434 = vmatprep.subr.mxu0 0.0
        %435 = vmatpush1.msra.mxu0 0.0
        %436 = vmatprep.subr.mxu0 0.0
        %437 = vmatpush1.msra.mxu0 0.0
        %438 = vmatprep.subr.mxu0 0.0
        %439 = vmatpush1.msra.mxu0 0.0
        %440 = vmatprep.subr.mxu0 0.0
        %441 = vmatpush1.msra.mxu0 0.0
        %442 = vmatprep.subr.mxu0 0.0
        %443 = vmatpush1.msra.mxu0 0.0
        %444 = vmatprep.subr.mxu0 0.0
        %445 = vmatpush1.msra.mxu0 0.0
        %446 = vmatprep.subr.mxu0 0.0
        %447 = vmatpush1.msra.mxu0 0.0
        %448 = vmatprep.subr.mxu0 0.0
        %449 = vmatpush1.msra.mxu0 0.0
        %450 = vmatprep.mubr.f32.mxu0 0.0
        %451 = vmatmul.mubr.f32.gmra.mrb[0].mxu0 %v384
        %v452 = vpop.f32.mrb[0].mxu0
        %v453 = vadd.f32 %v381, %v452
        %v454 = vpop.f32.mrb[0].mxu0
        %455 = vdwg.mxu0
        %v456 = vmax.f32 %v453, 0.0
        %v457 = vld [vmem:[#allocation7] sm:$0xff]
        %v458 = vld [vmem:[#allocation7 + $0x8] sm:$0xff]
        %v459 = vld [vmem:[#allocation7 + $0x10] sm:$0xff]
        %v460 = vld [vmem:[#allocation7 + $0x18] sm:$0xff]
        %v461 = vld [vmem:[%s6] sm:$0x1]
        %v463 = vlaneseq
        %v464 = vshrl.u32 %v463, 7
        %v465 = vsub.s32 0, %v464
        %v466 = vrot.slane %v461, %v465
        %v469 = vsel %vm341, %v456, 0
        %471 = vmatprep.subr.mxu0 0.0
        %472 = vmatpush1.msra.mxu0 %v457
        %473 = vmatprep.subr.mxu0 0.0
        %474 = vmatpush1.msra.mxu0 %v458
        %475 = vmatprep.subr.mxu0 0.0
        %476 = vmatpush1.msra.mxu0 %v459
        %477 = vmatprep.subr.mxu0 0.0
        %478 = vmatpush1.msra.mxu0 %v460
        %479 = vmatprep.subr.mxu0 0.0
        %480 = vmatpush1.msra.mxu0 0.0
        %481 = vmatprep.subr.mxu0 0.0
        %482 = vmatpush1.msra.mxu0 0.0
        %483 = vmatprep.subr.mxu0 0.0
        %484 = vmatpush1.msra.mxu0 0.0
        %485 = vmatprep.subr.mxu0 0.0
        %486 = vmatpush1.msra.mxu0 0.0
        %487 = vmatprep.subr.mxu0 0.0
        %488 = vmatpush1.msra.mxu0 0.0
        %489 = vmatprep.subr.mxu0 0.0
        %490 = vmatpush1.msra.mxu0 0.0
        %491 = vmatprep.subr.mxu0 0.0
        %492 = vmatpush1.msra.mxu0 0.0
        %493 = vmatprep.subr.mxu0 0.0
        %494 = vmatpush1.msra.mxu0 0.0
        %495 = vmatprep.subr.mxu0 0.0
        %496 = vmatpush1.msra.mxu0 0.0
        %497 = vmatprep.subr.mxu0 0.0
        %498 = vmatpush1.msra.mxu0 0.0
        %499 = vmatprep.subr.mxu0 0.0
        %500 = vmatpush1.msra.mxu0 0.0
        %501 = vmatprep.subr.mxu0 0.0
        %502 = vmatpush1.msra.mxu0 0.0
        %503 = vmatprep.subr.mxu0 0.0
        %504 = vmatpush1.msra.mxu0 0.0
        %505 = vmatprep.subr.mxu0 0.0
        %506 = vmatpush1.msra.mxu0 0.0
        %507 = vmatprep.subr.mxu0 0.0
        %508 = vmatpush1.msra.mxu0 0.0
        %509 = vmatprep.subr.mxu0 0.0
        %510 = vmatpush1.msra.mxu0 0.0
        %511 = vmatprep.subr.mxu0 0.0
        %512 = vmatpush1.msra.mxu0 0.0
        %513 = vmatprep.subr.mxu0 0.0
        %514 = vmatpush1.msra.mxu0 0.0
        %515 = vmatprep.subr.mxu0 0.0
        %516 = vmatpush1.msra.mxu0 0.0
        %517 = vmatprep.subr.mxu0 0.0
        %518 = vmatpush1.msra.mxu0 0.0
        %519 = vmatprep.subr.mxu0 0.0
        %520 = vmatpush1.msra.mxu0 0.0
        %521 = vmatprep.subr.mxu0 0.0
        %522 = vmatpush1.msra.mxu0 0.0
        %523 = vmatprep.subr.mxu0 0.0
        %524 = vmatpush1.msra.mxu0 0.0
        %525 = vmatprep.subr.mxu0 0.0
        %526 = vmatpush1.msra.mxu0 0.0
        %527 = vmatprep.subr.mxu0 0.0
        %528 = vmatpush1.msra.mxu0 0.0
        %529 = vmatprep.subr.mxu0 0.0
        %530 = vmatpush1.msra.mxu0 0.0
        %531 = vmatprep.subr.mxu0 0.0
        %532 = vmatpush1.msra.mxu0 0.0
        %533 = vmatprep.subr.mxu0 0.0
        %534 = vmatpush1.msra.mxu0 0.0
        %535 = vmatprep.mubr.f32.mxu0 0.0
        %536 = vmatmul.mubr.f32.gmra.mrb[0].mxu0 %v469
        %v537 = vpop.f32.mrb[0].mxu0
        %v538 = vadd.f32 %v466, %v537
        %v539 = vpop.f32.mrb[0].mxu0
        %540 = vdwg.mxu0
        %v541 = vtanh.pop %v538
        %543 = vrot.lane.b32.xlu0 %v541, 32
        %v544 = vpop.permute.xlu0 %543
        %546 = vrot.lane.b32.xlu0 %v541, 64
        %v547 = vpop.permute.xlu0 %546
        %549 = vrot.lane.b32.xlu0 %v541, 96
        %v550 = vpop.permute.xlu0 %549
        %v552 = vsel %vm341, %v541, %v544
        %vm553 = vcmask 523264
        %v554 = vsel %vm553, %v552, %v547
        %vm555 = vcmask 785408
        %v556 = vsel %vm555, %v554, %v550
        %v557 = vmul.f32 %v556, %v324
        %v558 = vmul.f32 %v556, %v325
        %559 = vst [vmem:[%s323] sm:$0xff] %v557
        %560 = vst [vmem:[%s323 + $0x8] sm:$0xff] %v558
        %s561 = sand.u32 %s185, 1
        %s562 = scalar_lea.sflag [#allocation4], %s561
        %s563 = sand.u32 %s185, 1
        %s564 = smul.addr %s563, 16
        %s565 = scalar_lea.vmem [#allocation8], %s564
        // Predicated region
        $region61: #{tpu_custom_call.1} parent=47 // pred_check
          %p566 = pneg %p195
        $region62: #{tpu_custom_call.1} parent=47 // pred_check_branch
          %568 = sbr.rel (%p566) target = $region64
        $region63: #{tpu_custom_call.1} parent=47 // pred_region
          %s570 = ssub.s32 256, 256
          %571 = vsyncadd %s562, %s570
          %s572 = smul.addr %s25, 2
          %s573 = smul.addr %s572, 128
          %s574 = scalar_lea.hbm %s7, %s573
          %s576 = sshll.u32 %s565, 4
          %s577 = int_to_ptr.vmem [resolvable:$true] %s576
          %579 = dma.vmem_to_hbm [thread:$0]  %s577, 256, %s574, %s562
        $region64: #{tpu_custom_call.1} parent=47 // pred_fallthru
          _
      $region48: #{tpu_custom_call.1} parent=5 // pred_fallthru
        _
      %p580 = scmp.le.s32.totalorder 2, %s20
      // Predicated region
      $region65: #{tpu_custom_call.1} parent=5 // pred_check
        %p581 = pneg %p580
      $region66: #{tpu_custom_call.1} parent=5 // pred_check_branch
        %583 = sbr.rel (%p581) target = $region68
      $region67: #{tpu_custom_call.1} parent=5 // pred_region
        %s584 = ssub.s32 %s20, 2
        // Predicated region
        $region69: #{tpu_custom_call.1} parent=67 // pred_check
          %p585 = pneg %p201
        $region70: #{tpu_custom_call.1} parent=67 // pred_check_branch
          %587 = sbr.rel (%p585) target = $region72
        $region71: #{tpu_custom_call.1} parent=67 // pred_region
          %s588 = sand.u32 %s186, 1
          %s589 = scalar_lea.sflag [#allocation4], %s588
          %s590 = sand.u32 %s186, 1
          %s591 = smul.addr %s590, 16
          %s592 = scalar_lea.vmem [#allocation8], %s591
          %593 = dma.done %s589, 256
        $region72: #{tpu_custom_call.1} parent=67 // pred_fallthru
          _
      $region68: #{tpu_custom_call.1} parent=5 // pred_fallthru
        _
    $region6: #{tpu_custom_call.1} parent=1 // loop_footer
      %s24 = sadd.s32 1, %s20
    $region7: #{tpu_custom_call.1} parent=1 // loop_footer_branch
      %19 = sbr.rel target = $region3
    $region8: #{tpu_custom_call.1} parent=1 // loop_exit
      _
    %594 = vsyncpa [#allocation3], 1
    %s595 = scalar_lea.sflag [#allocation3], 1
    %596 = vsyncpa %s595, 1
    %597 = vsyncpa [#allocation6], 1
    %598 = vsyncpa [#allocation4], 1
    %s599 = scalar_lea.sflag [#allocation4], 1
    %600 = vsyncpa %s599, 1

</llo_original>
